<compile_context>
chip_gen: v7x
topology: tpu7x:2x2x1
jax: 0.10.0
libtpu: 0.0.40
codegen_flags: <defaults>
</compile_context>

<pallas_src>
import functools

import jax
import jax.numpy as jnp
from jax.experimental import pallas as pl
from jax.experimental.pallas import tpu as pltpu

LANE = 128
SUBLANE = 8


def _ceil_to(x, m):
    return (x + m - 1) // m * m


def _pad2d(a, rows, cols):
    """Zero-pad a 2-D array up to [rows, cols]."""
    return jnp.pad(a, ((0, rows - a.shape[0]), (0, cols - a.shape[1])))


# ---------------------------------------------------------------------------
# Pallas kernel: the whole n_layer GRU-GCN stack, fully VMEM resident.
# ---------------------------------------------------------------------------
def _gru_gcn_fused_kernel(n_layer, lane_pad, a_ref, x_ref, h_ref, *refs):
    """refs = (w_big_0, b_big_0, whh_0, bhh_0, ..., out_ref)

    w_big_i : [Dp_i + P, 3P] bf16  rows 0:Dp_i = [Wxz | Wxr | Wxh] (zero-padded
                                   per-gate to P lanes), rows Dp_i: = [Whz|Whr|0]
    b_big_i : [1, 3P] f32          [bxz+bhz | bxr+bhr | bxh]  (per-gate padded)
    whh_i   : [P, P]  bf16         Whh zero-padded
    bhh_i   : [1, P]  f32          bhh zero-padded

    P = lane_pad = ceil(hidden/128)*128.  Gate slices below are all 128-lane
    aligned; padded lanes of h stay exactly zero across layers.
    """
    out_ref = refs[-1]
    p = refs[:-1]
    P = lane_pad
    f32 = jnp.float32
    bf16 = jnp.bfloat16

    a = a_ref[...]                          # [Np, Np]  bf16 normalized adjacency
    x = x_ref[...].astype(bf16)             # [Np, Dp0] layer-0 input (padded)

    for i in range(n_layer):                # static unroll over layers
        w_big, b_big, whh, bhh = p[4 * i:4 * (i + 1)]
        h_f32 = h_ref[i]                    # [Np, P] f32 hidden state (padded)
        h_bf = h_f32.astype(bf16)

        # One adjacency aggregation for the x- and h-streams together.
        xh = jnp.concatenate([x, h_bf], axis=1)                     # [Np, Dp+P]
        ag = jnp.dot(a, xh, preferred_element_type=f32)             # [Np, Dp+P]

        # One lane-dense projection for z, r and the x-part of the candidate;
        # paired biases folded in once.
        gates = jnp.dot(ag.astype(bf16), w_big[...],
                        preferred_element_type=f32) + b_big[...]    # [Np, 3P]

        z = jax.nn.sigmoid(gates[:, 0:P])                           # aligned slice
        r = jax.nn.sigmoid(gates[:, P:2 * P])                       # aligned slice

        # Candidate gate needs a fresh aggregation of (r * h).
        rh = (r * h_f32).astype(bf16)                               # pad lanes = 0
        arh = jnp.dot(a, rh, preferred_element_type=f32)            # [Np, P]
        ghh = jnp.dot(arh.astype(bf16), whh[...],
                      preferred_element_type=f32) + bhh[...]        # [Np, P]
        h_tilde = jnp.tanh(gates[:, 2 * P:3 * P] + ghh)

        h_new = z * h_f32 + (1.0 - z) * h_tilde                     # f32 gate math
        out_ref[i] = h_new                                          # 128-lane store

        x = h_new.astype(bf16)              # next layer consumes this layer's out


# ---------------------------------------------------------------------------
# Glue: normalized adjacency, parameter init / packing, jitted forward.
# ---------------------------------------------------------------------------
def build_norm_adj(edge_index, edge_weight, num_nodes):
    """A_hat[dst, src] = D^-1/2 (A + remaining self loops) D^-1/2 (gcn_norm)."""
    src = edge_index[0]
    dst = edge_index[1]
    w = edge_weight.astype(jnp.float32)
    a = jnp.zeros((num_nodes, num_nodes), jnp.float32).at[dst, src].add(w)
    # add_remaining_self_loops: only add a unit self loop where none exists.
    has_self = jnp.zeros((num_nodes,), jnp.float32).at[src].add(
        jnp.where(src == dst, 1.0, 0.0)) > 0
    a = a + jnp.diag(jnp.where(has_self, 0.0, 1.0))
    deg = jnp.sum(a, axis=1)                                  # weighted in-degree
    dinv = jnp.where(deg > 0, jax.lax.rsqrt(deg), 0.0)
    return dinv[:, None] * a * dinv[None, :]


def glorot(key, fan_in, fan_out):
    limit = jnp.sqrt(6.0 / (fan_in + fan_out))
    return jax.random.uniform(key, (fan_in, fan_out), jnp.float32, -limit, limit)


def init_params(key, input_size, hidden_size, n_layer):
    names = ("xz", "hz", "xr", "hr", "xh", "hh")
    params = []
    for i in range(n_layer):
        din = input_size if i == 0 else hidden_size
        layer = {}
        for name in names:
            key, kw, kb = jax.random.split(key, 3)
            fan_in = din if name.startswith("x") else hidden_size
            layer["w" + name] = glorot(kw, fan_in, hidden_size)
            layer["b" + name] = 0.1 * jax.random.normal(
                kb, (1, hidden_size), jnp.float32)
        params.append(layer)
    return params


def prepare_params(params):
    """Pad every gate to its own 128-lane block, stack x/h weights along the
    contraction dim, fold paired biases, cast matmul operands to bf16."""
    flat = []
    for layer in params:
        din, hid = layer["wxz"].shape
        P = _ceil_to(hid, LANE)
        dp = _ceil_to(din, LANE)
        wx = jnp.concatenate([_pad2d(layer["wxz"], dp, P),
                              _pad2d(layer["wxr"], dp, P),
                              _pad2d(layer["wxh"], dp, P)], axis=1)      # [dp, 3P]
        wh = jnp.concatenate([_pad2d(layer["whz"], P, P),
                              _pad2d(layer["whr"], P, P),
                              jnp.zeros((P, P), jnp.float32)], axis=1)   # [P, 3P]
        w_big = jnp.concatenate([wx, wh], axis=0).astype(jnp.bfloat16)   # [dp+P,3P]
        b_big = jnp.concatenate(
            [_pad2d(layer["bxz"] + layer["bhz"], 1, P),
             _pad2d(layer["bxr"] + layer["bhr"], 1, P),
             _pad2d(layer["bxh"], 1, P)], axis=1).astype(jnp.float32)    # [1, 3P]
        whh = _pad2d(layer["whh"], P, P).astype(jnp.bfloat16)            # [P, P]
        bhh = _pad2d(layer["bhh"], 1, P).astype(jnp.float32)             # [1, P]
        flat += [w_big, b_big, whh, bhh]
    return tuple(flat)


@functools.partial(jax.jit, static_argnames=("n_layer", "hidden"))
def forward(inp, edge_index, edge_weight, h_stack, flat_params, *, n_layer, hidden):
    """Fused graph_gru_gcn forward; returns stacked [n_layer, N, hidden] f32."""
    n = h_stack.shape[1]
    din0 = inp.shape[1]
    P = _ceil_to(hidden, LANE)
    dp0 = _ceil_to(din0, LANE)
    n_pad = _ceil_to(n, SUBLANE)

    a_hat = build_norm_adj(edge_index, edge_weight, n)
    a_hat = _pad2d(a_hat, n_pad, n_pad).astype(jnp.bfloat16)
    x0 = _pad2d(inp.astype(jnp.float32), n_pad, dp0)                 # f32, padded
    h_pad = jnp.pad(h_stack.astype(jnp.float32),
                    ((0, 0), (0, n_pad - n), (0, P - hidden)))       # f32, padded

    operands = (a_hat, x0, h_pad) + tuple(flat_params)
    vmem = pl.BlockSpec(memory_space=pltpu.MemorySpace.VMEM)

    out_bytes = n_layer * n_pad * P * 4
    total_bytes = sum(int(o.size) * o.dtype.itemsize for o in operands) + out_bytes
    vmem_limit = int(min(64 * 1024 * 1024,
                         max(32 * 1024 * 1024, 2 * total_bytes)))

    # TODO(synk): for large graphs (N in the thousands) replace the full-VMEM
    # residency with a gridded (parallel dest-node tile x arbitrary source-node
    # tile) pipeline (VMEM accumulator, Buffered(2) on A_hat) and batch graphs
    # block-diagonally so the matmul M dimension fills the MXU (>=128/256 rows).
    out = pl.pallas_call(
        functools.partial(_gru_gcn_fused_kernel, n_layer, P),
        out_shape=jax.ShapeDtypeStruct((n_layer, n_pad, P), jnp.float32),
        in_specs=[vmem] * len(operands),
        out_specs=vmem,
        compiler_params=pltpu.CompilerParams(vmem_limit_bytes=vmem_limit),
    )(*operands)
    return out[:, :n, :hidden]


# ---------------------------------------------------------------------------
# Pure-JAX f32 reference (original per-gate GCN formulation) for validation.
# ---------------------------------------------------------------------------
def forward_reference(inp, edge_index, edge_weight, h_stack, params):
    n = h_stack.shape[1]
    a = build_norm_adj(edge_index, edge_weight, n)

    def gcn(xx, w, b):
        return a @ (xx @ w) + b

    x = inp
    outs = []
    for i, p in enumerate(params):
        h = h_stack[i]
        z = jax.nn.sigmoid(gcn(x, p["wxz"], p["bxz"]) + gcn(h, p["whz"], p["bhz"]))
        r = jax.nn.sigmoid(gcn(x, p["wxr"], p["bxr"]) + gcn(h, p["whr"], p["bhr"]))
        ht = jnp.tanh(gcn(x, p["wxh"], p["bxh"]) + gcn(r * h, p["whh"], p["bhh"]))
        hn = z * h + (1.0 - z) * ht
        outs.append(hn)
        x = hn
    return jnp.stack(outs)


# ---------------------------------------------------------------------------
# Main
# ---------------------------------------------------------------------------
if __name__ == "__main__":
    N = 16            # number of graph nodes
    INPUT_SIZE = 8
    HIDDEN_SIZE = 32
    N_LAYER = 2
    E = 40            # number of edges

    key = jax.random.PRNGKey(0)
    k_x, k_ei, k_ew, k_h, k_p = jax.random.split(key, 5)

    x = jax.random.normal(k_x, (N, INPUT_SIZE), jnp.float32)
    edge_index = jax.random.randint(k_ei, (2, E), 0, N, dtype=jnp.int32)
    edge_weight = jax.random.uniform(k_ew, (E,), jnp.float32, 0.5, 1.5)
    h_stack = jax.random.normal(k_h, (N_LAYER, N, HIDDEN_SIZE), jnp.float32)

    params = init_params(k_p, INPUT_SIZE, HIDDEN_SIZE, N_LAYER)
    flat_params = prepare_params(params)

    h_out = forward(x, edge_index, edge_weight, h_stack, flat_params,
                    n_layer=N_LAYER, hidden=HIDDEN_SIZE)
    h_out = jax.block_until_ready(h_out)

    assert h_out.shape == (N_LAYER, N, HIDDEN_SIZE)
    assert bool(jnp.all(jnp.isfinite(h_out)))

    # Validate against the f32, per-gate reference (bf16 MXU operands in the
    # kernel and (A@x)@W reassociation => loose tolerance).
    ref = forward_reference(x, edge_index, edge_weight, h_stack, params)
    max_err = float(jnp.max(jnp.abs(h_out - ref)))
    assert max_err < 0.1, f"max abs error vs f32 reference: {max_err}"

    print("KERNEL_OK")
</pallas_src>

<mosaic_0001>
module attributes {stable_mosaic.version = 11 : i64} {
  func.func @_gru_gcn_fused_kernel(%arg0: memref<16x16xbf16, #tpu.memory_space<vmem>>, %arg1: memref<16x128xf32, #tpu.memory_space<vmem>>, %arg2: memref<2x16x128xf32, #tpu.memory_space<vmem>>, %arg3: memref<256x384xbf16, #tpu.memory_space<vmem>>, %arg4: memref<1x384xf32, #tpu.memory_space<vmem>>, %arg5: memref<128x128xbf16, #tpu.memory_space<vmem>>, %arg6: memref<1x128xf32, #tpu.memory_space<vmem>>, %arg7: memref<256x384xbf16, #tpu.memory_space<vmem>>, %arg8: memref<1x384xf32, #tpu.memory_space<vmem>>, %arg9: memref<128x128xbf16, #tpu.memory_space<vmem>>, %arg10: memref<1x128xf32, #tpu.memory_space<vmem>>, %arg11: memref<2x16x128xf32, #tpu.memory_space<vmem>>) attributes {dimension_semantics = [], scalar_prefetch = 0 : i64, scratch_operands = 0 : i64, tpu.core_type = #tpu.core_type<tc>} {
    %c0 = arith.constant 0 : index
    %c0_0 = arith.constant 0 : index
    %0 = vector.load %arg0[%c0, %c0_0] : memref<16x16xbf16, #tpu.memory_space<vmem>>, vector<16x16xbf16>
    %c0_1 = arith.constant 0 : index
    %c0_2 = arith.constant 0 : index
    %1 = vector.load %arg1[%c0_1, %c0_2] : memref<16x128xf32, #tpu.memory_space<vmem>>, vector<16x128xf32>
    %2 = arith.truncf %1 : vector<16x128xf32> to vector<16x128xbf16>
    %c0_3 = arith.constant 0 : index
    %c0_4 = arith.constant 0 : index
    %c0_5 = arith.constant 0 : index
    %3 = vector.load %arg2[%c0_3, %c0_4, %c0_5] : memref<2x16x128xf32, #tpu.memory_space<vmem>>, vector<1x16x128xf32>
    %4 = vector.shape_cast %3 : vector<1x16x128xf32> to vector<16x128xf32>
    %5 = arith.truncf %4 : vector<16x128xf32> to vector<16x128xbf16>
    %6 = tpu.concatenate %2, %5 in 1 : vector<16x128xbf16>, vector<16x128xbf16> -> vector<16x256xbf16>
    %cst = arith.constant dense<0.000000e+00> : vector<16x256xf32>
    %7 = tpu.matmul %0, %6, %cst {dimension_numbers = #tpu.dot_dimension_numbers<[1], [0], [0], [1], [0, 0, 1, 1], [], []>} : vector<16x16xbf16>, vector<16x256xbf16>, vector<16x256xf32> -> vector<16x256xf32>
    %8 = arith.truncf %7 : vector<16x256xf32> to vector<16x256xbf16>
    %c0_6 = arith.constant 0 : index
    %c0_7 = arith.constant 0 : index
    %9 = vector.load %arg3[%c0_6, %c0_7] : memref<256x384xbf16, #tpu.memory_space<vmem>>, vector<256x384xbf16>
    %cst_8 = arith.constant dense<0.000000e+00> : vector<16x384xf32>
    %10 = tpu.matmul %8, %9, %cst_8 {dimension_numbers = #tpu.dot_dimension_numbers<[1], [0], [0], [1], [0, 0, 1, 1], [], []>} : vector<16x256xbf16>, vector<256x384xbf16>, vector<16x384xf32> -> vector<16x384xf32>
    %c0_9 = arith.constant 0 : index
    %c0_10 = arith.constant 0 : index
    %11 = vector.load %arg4[%c0_9, %c0_10] : memref<1x384xf32, #tpu.memory_space<vmem>>, vector<1x384xf32>
    %12 = vector.broadcast %11 : vector<1x384xf32> to vector<16x384xf32>
    %13 = arith.addf %10, %12 : vector<16x384xf32>
    %14 = vector.extract_strided_slice %13 {offsets = [0, 0], sizes = [16, 128], strides = [1, 1]} : vector<16x384xf32> to vector<16x128xf32>
    %15 = arith.negf %14 : vector<16x128xf32>
    %16 = math.exp %15 : vector<16x128xf32>
    %cst_11 = arith.constant 1.000000e+00 : f32
    %17 = vector.broadcast %cst_11 : f32 to vector<16x128xf32>
    %18 = arith.addf %17, %16 : vector<16x128xf32>
    %19 = arith.divf %17, %18 : vector<16x128xf32>
    %20 = vector.extract_strided_slice %13 {offsets = [0, 128], sizes = [16, 128], strides = [1, 1]} : vector<16x384xf32> to vector<16x128xf32>
    %21 = arith.negf %20 : vector<16x128xf32>
    %22 = math.exp %21 : vector<16x128xf32>
    %cst_12 = arith.constant 1.000000e+00 : f32
    %23 = vector.broadcast %cst_12 : f32 to vector<16x128xf32>
    %24 = arith.addf %23, %22 : vector<16x128xf32>
    %25 = arith.divf %23, %24 : vector<16x128xf32>
    %26 = arith.mulf %25, %4 : vector<16x128xf32>
    %27 = arith.truncf %26 : vector<16x128xf32> to vector<16x128xbf16>
    %cst_13 = arith.constant dense<0.000000e+00> : vector<16x128xf32>
    %28 = tpu.matmul %0, %27, %cst_13 {dimension_numbers = #tpu.dot_dimension_numbers<[1], [0], [0], [1], [0, 0, 1, 1], [], []>} : vector<16x16xbf16>, vector<16x128xbf16>, vector<16x128xf32> -> vector<16x128xf32>
    %29 = arith.truncf %28 : vector<16x128xf32> to vector<16x128xbf16>
    %c0_14 = arith.constant 0 : index
    %c0_15 = arith.constant 0 : index
    %30 = vector.load %arg5[%c0_14, %c0_15] : memref<128x128xbf16, #tpu.memory_space<vmem>>, vector<128x128xbf16>
    %cst_16 = arith.constant dense<0.000000e+00> : vector<16x128xf32>
    %31 = tpu.matmul %29, %30, %cst_16 {dimension_numbers = #tpu.dot_dimension_numbers<[1], [0], [0], [1], [0, 0, 1, 1], [], []>} : vector<16x128xbf16>, vector<128x128xbf16>, vector<16x128xf32> -> vector<16x128xf32>
    %c0_17 = arith.constant 0 : index
    %c0_18 = arith.constant 0 : index
    %32 = vector.load %arg6[%c0_17, %c0_18] : memref<1x128xf32, #tpu.memory_space<vmem>>, vector<1x128xf32>
    %33 = vector.broadcast %32 : vector<1x128xf32> to vector<16x128xf32>
    %34 = arith.addf %31, %33 : vector<16x128xf32>
    %35 = vector.extract_strided_slice %13 {offsets = [0, 256], sizes = [16, 128], strides = [1, 1]} : vector<16x384xf32> to vector<16x128xf32>
    %36 = arith.addf %35, %34 : vector<16x128xf32>
    %37 = math.tanh %36 : vector<16x128xf32>
    %38 = arith.mulf %19, %4 : vector<16x128xf32>
    %cst_19 = arith.constant 1.000000e+00 : f32
    %39 = vector.broadcast %cst_19 : f32 to vector<16x128xf32>
    %40 = arith.subf %39, %19 : vector<16x128xf32>
    %41 = arith.mulf %40, %37 : vector<16x128xf32>
    %42 = arith.addf %38, %41 : vector<16x128xf32>
    %c0_20 = arith.constant 0 : index
    %c0_21 = arith.constant 0 : index
    %c0_22 = arith.constant 0 : index
    %43 = vector.load %arg11[%c0_20, %c0_21, %c0_22] : memref<2x16x128xf32, #tpu.memory_space<vmem>>, vector<1x16x128xf32>
    %44 = vector.shape_cast %43 : vector<1x16x128xf32> to vector<16x128xf32>
    %45 = vector.shape_cast %42 : vector<16x128xf32> to vector<1x16x128xf32>
    tpu.vector_store %arg11[%c0_20, %c0_21, %c0_22], %45 {strides = array<i32>} : memref<2x16x128xf32, #tpu.memory_space<vmem>>, vector<1x16x128xf32>,
    %46 = arith.truncf %42 : vector<16x128xf32> to vector<16x128xbf16>
    %c1 = arith.constant 1 : index
    %c0_23 = arith.constant 0 : index
    %c0_24 = arith.constant 0 : index
    %47 = vector.load %arg2[%c1, %c0_23, %c0_24] : memref<2x16x128xf32, #tpu.memory_space<vmem>>, vector<1x16x128xf32>
    %48 = vector.shape_cast %47 : vector<1x16x128xf32> to vector<16x128xf32>
    %49 = arith.truncf %48 : vector<16x128xf32> to vector<16x128xbf16>
    %50 = tpu.concatenate %46, %49 in 1 : vector<16x128xbf16>, vector<16x128xbf16> -> vector<16x256xbf16>
    %cst_25 = arith.constant dense<0.000000e+00> : vector<16x256xf32>
    %51 = tpu.matmul %0, %50, %cst_25 {dimension_numbers = #tpu.dot_dimension_numbers<[1], [0], [0], [1], [0, 0, 1, 1], [], []>} : vector<16x16xbf16>, vector<16x256xbf16>, vector<16x256xf32> -> vector<16x256xf32>
    %52 = arith.truncf %51 : vector<16x256xf32> to vector<16x256xbf16>
    %c0_26 = arith.constant 0 : index
    %c0_27 = arith.constant 0 : index
    %53 = vector.load %arg7[%c0_26, %c0_27] : memref<256x384xbf16, #tpu.memory_space<vmem>>, vector<256x384xbf16>
    %cst_28 = arith.constant dense<0.000000e+00> : vector<16x384xf32>
    %54 = tpu.matmul %52, %53, %cst_28 {dimension_numbers = #tpu.dot_dimension_numbers<[1], [0], [0], [1], [0, 0, 1, 1], [], []>} : vector<16x256xbf16>, vector<256x384xbf16>, vector<16x384xf32> -> vector<16x384xf32>
    %c0_29 = arith.constant 0 : index
    %c0_30 = arith.constant 0 : index
    %55 = vector.load %arg8[%c0_29, %c0_30] : memref<1x384xf32, #tpu.memory_space<vmem>>, vector<1x384xf32>
    %56 = vector.broadcast %55 : vector<1x384xf32> to vector<16x384xf32>
    %57 = arith.addf %54, %56 : vector<16x384xf32>
    %58 = vector.extract_strided_slice %57 {offsets = [0, 0], sizes = [16, 128], strides = [1, 1]} : vector<16x384xf32> to vector<16x128xf32>
    %59 = arith.negf %58 : vector<16x128xf32>
    %60 = math.exp %59 : vector<16x128xf32>
    %cst_31 = arith.constant 1.000000e+00 : f32
    %61 = vector.broadcast %cst_31 : f32 to vector<16x128xf32>
    %62 = arith.addf %61, %60 : vector<16x128xf32>
    %63 = arith.divf %61, %62 : vector<16x128xf32>
    %64 = vector.extract_strided_slice %57 {offsets = [0, 128], sizes = [16, 128], strides = [1, 1]} : vector<16x384xf32> to vector<16x128xf32>
    %65 = arith.negf %64 : vector<16x128xf32>
    %66 = math.exp %65 : vector<16x128xf32>
    %cst_32 = arith.constant 1.000000e+00 : f32
    %67 = vector.broadcast %cst_32 : f32 to vector<16x128xf32>
    %68 = arith.addf %67, %66 : vector<16x128xf32>
    %69 = arith.divf %67, %68 : vector<16x128xf32>
    %70 = arith.mulf %69, %48 : vector<16x128xf32>
    %71 = arith.truncf %70 : vector<16x128xf32> to vector<16x128xbf16>
    %cst_33 = arith.constant dense<0.000000e+00> : vector<16x128xf32>
    %72 = tpu.matmul %0, %71, %cst_33 {dimension_numbers = #tpu.dot_dimension_numbers<[1], [0], [0], [1], [0, 0, 1, 1], [], []>} : vector<16x16xbf16>, vector<16x128xbf16>, vector<16x128xf32> -> vector<16x128xf32>
    %73 = arith.truncf %72 : vector<16x128xf32> to vector<16x128xbf16>
    %c0_34 = arith.constant 0 : index
    %c0_35 = arith.constant 0 : index
    %74 = vector.load %arg9[%c0_34, %c0_35] : memref<128x128xbf16, #tpu.memory_space<vmem>>, vector<128x128xbf16>
    %cst_36 = arith.constant dense<0.000000e+00> : vector<16x128xf32>
    %75 = tpu.matmul %73, %74, %cst_36 {dimension_numbers = #tpu.dot_dimension_numbers<[1], [0], [0], [1], [0, 0, 1, 1], [], []>} : vector<16x128xbf16>, vector<128x128xbf16>, vector<16x128xf32> -> vector<16x128xf32>
    %c0_37 = arith.constant 0 : index
    %c0_38 = arith.constant 0 : index
    %76 = vector.load %arg10[%c0_37, %c0_38] : memref<1x128xf32, #tpu.memory_space<vmem>>, vector<1x128xf32>
    %77 = vector.broadcast %76 : vector<1x128xf32> to vector<16x128xf32>
    %78 = arith.addf %75, %77 : vector<16x128xf32>
    %79 = vector.extract_strided_slice %57 {offsets = [0, 256], sizes = [16, 128], strides = [1, 1]} : vector<16x384xf32> to vector<16x128xf32>
    %80 = arith.addf %79, %78 : vector<16x128xf32>
    %81 = math.tanh %80 : vector<16x128xf32>
    %82 = arith.mulf %63, %48 : vector<16x128xf32>
    %cst_39 = arith.constant 1.000000e+00 : f32
    %83 = vector.broadcast %cst_39 : f32 to vector<16x128xf32>
    %84 = arith.subf %83, %63 : vector<16x128xf32>
    %85 = arith.mulf %84, %81 : vector<16x128xf32>
    %86 = arith.addf %82, %85 : vector<16x128xf32>
    %c1_40 = arith.constant 1 : index
    %c0_41 = arith.constant 0 : index
    %c0_42 = arith.constant 0 : index
    %87 = vector.load %arg11[%c1_40, %c0_41, %c0_42] : memref<2x16x128xf32, #tpu.memory_space<vmem>>, vector<1x16x128xf32>
    %88 = vector.shape_cast %87 : vector<1x16x128xf32> to vector<16x128xf32>
    %89 = vector.shape_cast %86 : vector<16x128xf32> to vector<1x16x128xf32>
    tpu.vector_store %arg11[%c1_40, %c0_41, %c0_42], %89 {strides = array<i32>} : memref<2x16x128xf32, #tpu.memory_space<vmem>>, vector<1x16x128xf32>,
    return
  }
}

</mosaic_0001>

<llo_original>
// kernel: forward.1
$region0: #{forward.1}
  #allocation0 [shape = 'u32[]', space=smem, size = 0x4, offset = 0x4, fixed_abs, tag = 'smem constant byte address 0x4 - core index']
  #allocation1 [shape = 'u32[144,128]{1,0:T(1,128)}', space=vmem, size = 0x12000, scoped, tag = 'internal scratch']
  %s0 = inlined_call_operand.vmem [shape: bf16[16,16], index: 0, kind: input, shape index: {}]
  %s1 = inlined_call_operand.vmem [shape: f32[16,128], index: 1, kind: input, shape index: {}]
  %s2 = inlined_call_operand.vmem [shape: f32[2,16,128], index: 2, kind: input, shape index: {}]
  %s3 = inlined_call_operand.vmem [shape: bf16[256,384], index: 3, kind: input, shape index: {}]
  %s4 = inlined_call_operand.vmem [shape: f32[1,384], index: 4, kind: input, shape index: {}]
  %s5 = inlined_call_operand.vmem [shape: bf16[128,128], index: 5, kind: input, shape index: {}]
  %s6 = inlined_call_operand.vmem [shape: f32[1,128], index: 6, kind: input, shape index: {}]
  %s7 = inlined_call_operand.vmem [shape: bf16[256,384], index: 7, kind: input, shape index: {}]
  %s8 = inlined_call_operand.vmem [shape: f32[1,384], index: 8, kind: input, shape index: {}]
  %s9 = inlined_call_operand.vmem [shape: bf16[128,128], index: 9, kind: input, shape index: {}]
  %s10 = inlined_call_operand.vmem [shape: f32[1,128], index: 10, kind: input, shape index: {}]
  %s11 = inlined_call_operand.hbm [shape: f32[2,16,128], index: 11, kind: output, shape index: {}]
  %s12 = sld [smem:[#allocation0]]
  $region54: #{forward.1} parent=0
    _
  %s14 = ssub.s32 1, %s12
  %s15 = scalar_select 0, %s14, %s12
  $region1: #{forward.1} parent=0
    #allocation2 [shape = 'u8[16384]{0}', space=vmem, size = 0x4000, scoped, tag = 'output window, operand 0, single buffered']
    #allocation3 [shape = 's32[1]{0}', space=sflag, size = 0x4, scoped, tag = 'scoped memory for forward.1']
    %16 = vsyncpa [#allocation3], 0
    // Predicated region
    $region2: #{forward.1} parent=1 // pred_check
      _
    $region3: #{forward.1} parent=1 // pred_check_branch
      %18 = sbr.rel (0) target = $region5
    $region4: #{forward.1} parent=1 // pred_region
      _
    $region5: #{forward.1} parent=1 // pred_fallthru
      _
    // Predicated region
    $region6: #{forward.1} parent=1 // pred_check
      _
    $region7: #{forward.1} parent=1 // pred_check_branch
      %20 = sbr.rel (0) target = $region9
    $region8: #{forward.1} parent=1 // pred_region
      _
    $region9: #{forward.1} parent=1 // pred_fallthru
      _
    // Predicated region
    $region10: #{forward.1} parent=1 // pred_check
      _
    $region11: #{forward.1} parent=1 // pred_check_branch
      %22 = sbr.rel (0) target = $region13
    $region12: #{forward.1} parent=1 // pred_region
      _
    $region13: #{forward.1} parent=1 // pred_fallthru
      _
    // Predicated region
    $region14: #{forward.1} parent=1 // pred_check
      _
    $region15: #{forward.1} parent=1 // pred_check_branch
      %24 = sbr.rel (0) target = $region17
    $region16: #{forward.1} parent=1 // pred_region
      _
    $region17: #{forward.1} parent=1 // pred_fallthru
      _
    // Predicated region
    $region18: #{forward.1} parent=1 // pred_check
      _
    $region19: #{forward.1} parent=1 // pred_check_branch
      %26 = sbr.rel (0) target = $region21
    $region20: #{forward.1} parent=1 // pred_region
      _
    $region21: #{forward.1} parent=1 // pred_fallthru
      _
    // Predicated region
    $region22: #{forward.1} parent=1 // pred_check
      _
    $region23: #{forward.1} parent=1 // pred_check_branch
      %28 = sbr.rel (0) target = $region25
    $region24: #{forward.1} parent=1 // pred_region
      _
    $region25: #{forward.1} parent=1 // pred_fallthru
      _
    // Predicated region
    $region26: #{forward.1} parent=1 // pred_check
      _
    $region27: #{forward.1} parent=1 // pred_check_branch
      %30 = sbr.rel (0) target = $region29
    $region28: #{forward.1} parent=1 // pred_region
      _
    $region29: #{forward.1} parent=1 // pred_fallthru
      _
    // Predicated region
    $region30: #{forward.1} parent=1 // pred_check
      _
    $region31: #{forward.1} parent=1 // pred_check_branch
      %32 = sbr.rel (0) target = $region33
    $region32: #{forward.1} parent=1 // pred_region
      _
    $region33: #{forward.1} parent=1 // pred_fallthru
      _
    // Predicated region
    $region34: #{forward.1} parent=1 // pred_check
      _
    $region35: #{forward.1} parent=1 // pred_check_branch
      %34 = sbr.rel (0) target = $region37
    $region36: #{forward.1} parent=1 // pred_region
      _
    $region37: #{forward.1} parent=1 // pred_fallthru
      _
    // Predicated region
    $region38: #{forward.1} parent=1 // pred_check
      _
    $region39: #{forward.1} parent=1 // pred_check_branch
      %36 = sbr.rel (0) target = $region41
    $region40: #{forward.1} parent=1 // pred_region
      _
    $region41: #{forward.1} parent=1 // pred_fallthru
      _
    // Predicated region
    $region42: #{forward.1} parent=1 // pred_check
      _
    $region43: #{forward.1} parent=1 // pred_check_branch
      %38 = sbr.rel (0) target = $region45
    $region44: #{forward.1} parent=1 // pred_region
      _
    $region45: #{forward.1} parent=1 // pred_fallthru
      _
    %v40 = vld [vmem:[%s0] sm:$0xf]
    %v41 = vld [vmem:[%s0 + $0x4] sm:$0xf]
    %v42 = vld [vmem:[%s1] sm:$0xff]
    %v43 = vld [vmem:[%s1 + $0x8] sm:$0xff]
    %v44 = vpack.c.bf16 %v43, %v42
    %v45 = vld [vmem:[%s2] sm:$0xff]
    %v46 = vld [vmem:[%s2 + $0x8] sm:$0xff]
    %v47 = vpack.c.bf16 %v46, %v45
    %v50 = vunpack.c.l.b16 %v40
    %v51 = vunpack.c.l.b16 %v41
    %v52 = vpack.c.b16 %v51, %v50
    %vm53 = vcmask 130048
    %v55 = vsel %vm53, %v52, 0
    %57 = vmatprep.subr.bf16.mxu0 %v47
    %58 = vmatpush1.bf16.msra.mxu0 %v44
    %59 = vmatprep.subr.bf16.mxu0 0
    %60 = vmatpush1.bf16.msra.mxu0 0
    %61 = vmatprep.subr.bf16.mxu0 0
    %62 = vmatpush1.bf16.msra.mxu0 0
    %63 = vmatprep.subr.bf16.mxu0 0
    %64 = vmatpush1.bf16.msra.mxu0 0
    %65 = vmatprep.subr.bf16.mxu0 0
    %66 = vmatpush1.bf16.msra.mxu0 0
    %67 = vmatprep.subr.bf16.mxu0 0
    %68 = vmatpush1.bf16.msra.mxu0 0
    %69 = vmatprep.subr.bf16.mxu0 0
    %70 = vmatpush1.bf16.msra.mxu0 0
    %71 = vmatprep.subr.bf16.mxu0 0
    %72 = vmatpush1.bf16.msra.mxu0 0
    %73 = vmatprep.subr.bf16.mxu0 0
    %74 = vmatpush1.bf16.msra.mxu0 0
    %75 = vmatprep.subr.bf16.mxu0 0
    %76 = vmatpush1.bf16.msra.mxu0 0
    %77 = vmatprep.subr.bf16.mxu0 0
    %78 = vmatpush1.bf16.msra.mxu0 0
    %79 = vmatprep.subr.bf16.mxu0 0
    %80 = vmatpush1.bf16.msra.mxu0 0
    %81 = vmatprep.subr.bf16.mxu0 0
    %82 = vmatpush1.bf16.msra.mxu0 0
    %83 = vmatprep.subr.bf16.mxu0 0
    %84 = vmatpush1.bf16.msra.mxu0 0
    %85 = vmatprep.subr.bf16.mxu0 0
    %86 = vmatpush1.bf16.msra.mxu0 0
    %87 = vmatprep.subr.bf16.mxu0 0
    %88 = vmatpush1.bf16.msra.mxu0 0
    %89 = vmatprep.mubr.bf16.mxu0 0
    %90 = vmatmul.mubr.bf16.gmra.mrb[0].mxu0 %v55
    %v91 = vpop.f32.mrb[0].mxu0
    %v92 = vadd.f32 0.0, %v91
    %v93 = vpop.f32.mrb[0].mxu0
    %v94 = vadd.f32 0.0, %v93
    %v95 = vpop.f32.mrb[0].mxu0
    %v96 = vadd.f32 0.0, %v95
    %v97 = vpop.f32.mrb[0].mxu0
    %v98 = vadd.f32 0.0, %v97
    %99 = vdwg.mxu0
    %v100 = vpack.c.bf16 %v96, %v92
    %v101 = vpack.c.bf16 %v98, %v94
    %v102 = vld [vmem:[%s3] sm:$0xff]
    %v103 = vld [vmem:[%s3 + $0x8] sm:$0xf]
    %v104 = vld [vmem:[%s3 + $0xc] sm:$0xff]
    %v105 = vld [vmem:[%s3 + $0x14] sm:$0xf]
    %v106 = vld [vmem:[%s3 + $0x18] sm:$0xff]
    %v107 = vld [vmem:[%s3 + $0x20] sm:$0xf]
    %v108 = vld [vmem:[%s3 + $0x24] sm:$0xff]
    %v109 = vld [vmem:[%s3 + $0x2c] sm:$0xf]
    %v110 = vld [vmem:[%s3 + $0x30] sm:$0xff]
    %v111 = vld [vmem:[%s3 + $0x38] sm:$0xf]
    %v112 = vld [vmem:[%s3 + $0x3c] sm:$0xff]
    %v113 = vld [vmem:[%s3 + $0x44] sm:$0xf]
    %v114 = vld [vmem:[%s3 + $0x48] sm:$0xff]
    %v115 = vld [vmem:[%s3 + $0x50] sm:$0xf]
    %v116 = vld [vmem:[%s3 + $0x54] sm:$0xff]
    %v117 = vld [vmem:[%s3 + $0x5c] sm:$0xf]
    %v118 = vld [vmem:[%s3 + $0x60] sm:$0xff]
    %v119 = vld [vmem:[%s3 + $0x68] sm:$0xf]
    %v120 = vld [vmem:[%s3 + $0x6c] sm:$0xff]
    %v121 = vld [vmem:[%s3 + $0x74] sm:$0xf]
    %v122 = vld [vmem:[%s3 + $0x78] sm:$0xff]
    %v123 = vld [vmem:[%s3 + $0x80] sm:$0xf]
    %v124 = vld [vmem:[%s3 + $0x84] sm:$0xff]
    %v125 = vld [vmem:[%s3 + $0x8c] sm:$0xf]
    %v126 = vld [vmem:[%s3 + $0x90] sm:$0xff]
    %v127 = vld [vmem:[%s3 + $0x98] sm:$0xf]
    %v128 = vld [vmem:[%s3 + $0x9c] sm:$0xff]
    %v129 = vld [vmem:[%s3 + $0xa4] sm:$0xf]
    %v130 = vld [vmem:[%s3 + $0xa8] sm:$0xff]
    %v131 = vld [vmem:[%s3 + $0xb0] sm:$0xf]
    %v132 = vld [vmem:[%s3 + $0xb4] sm:$0xff]
    %v133 = vld [vmem:[%s3 + $0xbc] sm:$0xf]
    %v134 = vld [vmem:[%s3 + $0xc0] sm:$0xff]
    %v135 = vld [vmem:[%s3 + $0xc8] sm:$0xf]
    %v136 = vld [vmem:[%s3 + $0xcc] sm:$0xff]
    %v137 = vld [vmem:[%s3 + $0xd4] sm:$0xf]
    %v138 = vld [vmem:[%s3 + $0xd8] sm:$0xff]
    %v139 = vld [vmem:[%s3 + $0xe0] sm:$0xf]
    %v140 = vld [vmem:[%s3 + $0xe4] sm:$0xff]
    %v141 = vld [vmem:[%s3 + $0xec] sm:$0xf]
    %v142 = vld [vmem:[%s3 + $0xf0] sm:$0xff]
    %v143 = vld [vmem:[%s3 + $0xf8] sm:$0xf]
    %v144 = vld [vmem:[%s3 + $0xfc] sm:$0xff]
    %v145 = vld [vmem:[%s3 + $0x104] sm:$0xf]
    %v146 = vld [vmem:[%s3 + $0x108] sm:$0xff]
    %v147 = vld [vmem:[%s3 + $0x110] sm:$0xf]
    %v148 = vld [vmem:[%s3 + $0x114] sm:$0xff]
    %v149 = vld [vmem:[%s3 + $0x11c] sm:$0xf]
    %v150 = vld [vmem:[%s3 + $0x120] sm:$0xff]
    %v151 = vld [vmem:[%s3 + $0x128] sm:$0xf]
    %v152 = vld [vmem:[%s3 + $0x12c] sm:$0xff]
    %v153 = vld [vmem:[%s3 + $0x134] sm:$0xf]
    %v154 = vld [vmem:[%s3 + $0x138] sm:$0xff]
    %v155 = vld [vmem:[%s3 + $0x140] sm:$0xf]
    %v156 = vld [vmem:[%s3 + $0x144] sm:$0xff]
    %v157 = vld [vmem:[%s3 + $0x14c] sm:$0xf]
    %v158 = vld [vmem:[%s3 + $0x150] sm:$0xff]
    %v159 = vld [vmem:[%s3 + $0x158] sm:$0xf]
    %v160 = vld [vmem:[%s3 + $0x15c] sm:$0xff]
    %v161 = vld [vmem:[%s3 + $0x164] sm:$0xf]
    %v162 = vld [vmem:[%s3 + $0x168] sm:$0xff]
    %v163 = vld [vmem:[%s3 + $0x170] sm:$0xf]
    %v164 = vld [vmem:[%s3 + $0x174] sm:$0xff]
    %v165 = vld [vmem:[%s3 + $0x17c] sm:$0xf]
    %v166 = vld [vmem:[%s4] sm:$0x7]
    %v168 = vlaneseq
    %v169 = vshrl.u32 %v168, 7
    %v170 = vsub.s32 0, %v169
    %v171 = vrot.slane %v166, %v170
    %v172 = vlaneseq
    %v173 = vshrl.u32 %v172, 7
    %v174 = vsub.s32 1, %v173
    %v175 = vrot.slane %v166, %v174
    %v176 = vlaneseq
    %v177 = vshrl.u32 %v176, 7
    %v178 = vsub.s32 2, %v177
    %v179 = vrot.slane %v166, %v178
    %v247 = vunpack.c.l.b16 %v102
    %v248 = vunpack.c.h.b16 %v102
    %v249 = vunpack.c.l.b16 %v103
    %v250 = vunpack.c.l.b16 %v104
    %v251 = vunpack.c.h.b16 %v104
    %v252 = vunpack.c.l.b16 %v105
    %v253 = vunpack.c.l.b16 %v106
    %v254 = vunpack.c.h.b16 %v106
    %v255 = vunpack.c.l.b16 %v107
    %v256 = vunpack.c.l.b16 %v108
    %v257 = vunpack.c.h.b16 %v108
    %v258 = vunpack.c.l.b16 %v109
    %v259 = vunpack.c.l.b16 %v110
    %v260 = vunpack.c.h.b16 %v110
    %v261 = vunpack.c.l.b16 %v111
    %v262 = vunpack.c.l.b16 %v112
    %v263 = vunpack.c.h.b16 %v112
    %v264 = vunpack.c.l.b16 %v113
    %v265 = vunpack.c.l.b16 %v114
    %v266 = vunpack.c.h.b16 %v114
    %v267 = vunpack.c.l.b16 %v115
    %v268 = vunpack.c.l.b16 %v116
    %v269 = vunpack.c.h.b16 %v116
    %v270 = vunpack.c.l.b16 %v117
    %v271 = vunpack.c.l.b16 %v118
    %v272 = vunpack.c.h.b16 %v118
    %v273 = vunpack.c.l.b16 %v119
    %v274 = vunpack.c.l.b16 %v120
    %v275 = vunpack.c.h.b16 %v120
    %v276 = vunpack.c.l.b16 %v121
    %v277 = vunpack.c.l.b16 %v122
    %v278 = vunpack.c.h.b16 %v122
    %v279 = vunpack.c.l.b16 %v123
    %v280 = vunpack.c.l.b16 %v124
    %v281 = vunpack.c.h.b16 %v124
    %v282 = vunpack.c.l.b16 %v125
    %v283 = vunpack.c.l.b16 %v126
    %v284 = vunpack.c.h.b16 %v126
    %v285 = vunpack.c.l.b16 %v127
    %v286 = vunpack.c.l.b16 %v128
    %v287 = vunpack.c.h.b16 %v128
    %v288 = vunpack.c.l.b16 %v129
    %v289 = vunpack.c.l.b16 %v130
    %v290 = vunpack.c.h.b16 %v130
    %v291 = vunpack.c.l.b16 %v131
    %v292 = vunpack.c.l.b16 %v132
    %v293 = vunpack.c.h.b16 %v132
    %v294 = vunpack.c.l.b16 %v133
    %v295 = vunpack.c.l.b16 %v134
    %v296 = vunpack.c.h.b16 %v134
    %v297 = vunpack.c.l.b16 %v135
    %v298 = vunpack.c.l.b16 %v136
    %v299 = vunpack.c.h.b16 %v136
    %v300 = vunpack.c.l.b16 %v137
    %v301 = vunpack.c.l.b16 %v138
    %v302 = vunpack.c.h.b16 %v138
    %v303 = vunpack.c.l.b16 %v139
    %v304 = vunpack.c.l.b16 %v140
    %v305 = vunpack.c.h.b16 %v140
    %v306 = vunpack.c.l.b16 %v141
    %v307 = vunpack.c.l.b16 %v142
    %v308 = vunpack.c.h.b16 %v142
    %v309 = vunpack.c.l.b16 %v143
    %v310 = vunpack.c.l.b16 %v144
    %v311 = vunpack.c.h.b16 %v144
    %v312 = vunpack.c.l.b16 %v145
    %v313 = vunpack.c.l.b16 %v146
    %v314 = vunpack.c.h.b16 %v146
    %v315 = vunpack.c.l.b16 %v147
    %v316 = vunpack.c.l.b16 %v148
    %v317 = vunpack.c.h.b16 %v148
    %v318 = vunpack.c.l.b16 %v149
    %v319 = vunpack.c.l.b16 %v150
    %v320 = vunpack.c.h.b16 %v150
    %v321 = vunpack.c.l.b16 %v151
    %v322 = vunpack.c.l.b16 %v152
    %v323 = vunpack.c.h.b16 %v152
    %v324 = vunpack.c.l.b16 %v153
    %v325 = vunpack.c.l.b16 %v154
    %v326 = vunpack.c.h.b16 %v154
    %v327 = vunpack.c.l.b16 %v155
    %v328 = vunpack.c.l.b16 %v156
    %v329 = vunpack.c.h.b16 %v156
    %v330 = vunpack.c.l.b16 %v157
    %v331 = vunpack.c.l.b16 %v158
    %v332 = vunpack.c.h.b16 %v158
    %v333 = vunpack.c.l.b16 %v159
    %v334 = vunpack.c.l.b16 %v160
    %v335 = vunpack.c.h.b16 %v160
    %v336 = vunpack.c.l.b16 %v161
    %v337 = vunpack.c.l.b16 %v162
    %v338 = vunpack.c.h.b16 %v162
    %v339 = vunpack.c.l.b16 %v163
    %v340 = vunpack.c.l.b16 %v164
    %v341 = vunpack.c.h.b16 %v164
    %v342 = vunpack.c.l.b16 %v165
    %v343 = vpack.c.b16 %v250, %v247
    %v344 = vpack.c.b16 %v251, %v248
    %v345 = vpack.c.b16 %v252, %v249
    %v346 = vpack.c.b16 %v256, %v253
    %v347 = vpack.c.b16 %v257, %v254
    %v348 = vpack.c.b16 %v258, %v255
    %v349 = vpack.c.b16 %v262, %v259
    %v350 = vpack.c.b16 %v263, %v260
    %v351 = vpack.c.b16 %v264, %v261
    %v352 = vpack.c.b16 %v268, %v265
    %v353 = vpack.c.b16 %v269, %v266
    %v354 = vpack.c.b16 %v270, %v267
    %v355 = vpack.c.b16 %v274, %v271
    %v356 = vpack.c.b16 %v275, %v272
    %v357 = vpack.c.b16 %v276, %v273
    %v358 = vpack.c.b16 %v280, %v277
    %v359 = vpack.c.b16 %v281, %v278
    %v360 = vpack.c.b16 %v282, %v279
    %v361 = vpack.c.b16 %v286, %v283
    %v362 = vpack.c.b16 %v287, %v284
    %v363 = vpack.c.b16 %v288, %v285
    %v364 = vpack.c.b16 %v292, %v289
    %v365 = vpack.c.b16 %v293, %v290
    %v366 = vpack.c.b16 %v294, %v291
    %v367 = vpack.c.b16 %v298, %v295
    %v368 = vpack.c.b16 %v299, %v296
    %v369 = vpack.c.b16 %v300, %v297
    %v370 = vpack.c.b16 %v304, %v301
    %v371 = vpack.c.b16 %v305, %v302
    %v372 = vpack.c.b16 %v306, %v303
    %v373 = vpack.c.b16 %v310, %v307
    %v374 = vpack.c.b16 %v311, %v308
    %v375 = vpack.c.b16 %v312, %v309
    %v376 = vpack.c.b16 %v316, %v313
    %v377 = vpack.c.b16 %v317, %v314
    %v378 = vpack.c.b16 %v318, %v315
    %v379 = vpack.c.b16 %v322, %v319
    %v380 = vpack.c.b16 %v323, %v320
    %v381 = vpack.c.b16 %v324, %v321
    %v382 = vpack.c.b16 %v328, %v325
    %v383 = vpack.c.b16 %v329, %v326
    %v384 = vpack.c.b16 %v330, %v327
    %v385 = vpack.c.b16 %v334, %v331
    %v386 = vpack.c.b16 %v335, %v332
    %v387 = vpack.c.b16 %v336, %v333
    %v388 = vpack.c.b16 %v340, %v337
    %v389 = vpack.c.b16 %v341, %v338
    %v390 = vpack.c.b16 %v342, %v339
    %439 = vmatprep.subr.bf16.mxu0 %v344
    %440 = vmatpush1.bf16.msra.mxu0 %v343
    %441 = vmatprep.subr.bf16.mxu0 %v347
    %442 = vmatpush1.bf16.msra.mxu0 %v346
    %443 = vmatprep.subr.bf16.mxu0 %v350
    %444 = vmatpush1.bf16.msra.mxu0 %v349
    %445 = vmatprep.subr.bf16.mxu0 %v353
    %446 = vmatpush1.bf16.msra.mxu0 %v352
    %447 = vmatprep.subr.bf16.mxu0 %v356
    %448 = vmatpush1.bf16.msra.mxu0 %v355
    %449 = vmatprep.subr.bf16.mxu0 %v359
    %450 = vmatpush1.bf16.msra.mxu0 %v358
    %451 = vmatprep.subr.bf16.mxu0 %v362
    %452 = vmatpush1.bf16.msra.mxu0 %v361
    %453 = vmatprep.subr.bf16.mxu0 %v365
    %454 = vmatpush1.bf16.msra.mxu0 %v364
    %455 = vmatprep.subr.bf16.mxu0 %v368
    %456 = vmatpush1.bf16.msra.mxu0 %v367
    %457 = vmatprep.subr.bf16.mxu0 %v371
    %458 = vmatpush1.bf16.msra.mxu0 %v370
    %459 = vmatprep.subr.bf16.mxu0 %v374
    %460 = vmatpush1.bf16.msra.mxu0 %v373
    %461 = vmatprep.subr.bf16.mxu0 %v377
    %462 = vmatpush1.bf16.msra.mxu0 %v376
    %463 = vmatprep.subr.bf16.mxu0 %v380
    %464 = vmatpush1.bf16.msra.mxu0 %v379
    %465 = vmatprep.subr.bf16.mxu0 %v383
    %466 = vmatpush1.bf16.msra.mxu0 %v382
    %467 = vmatprep.subr.bf16.mxu0 %v386
    %468 = vmatpush1.bf16.msra.mxu0 %v385
    %469 = vmatprep.subr.bf16.mxu0 %v389
    %470 = vmatpush1.bf16.msra.mxu0 %v388
    %471 = vmatprep.mubr.bf16.mxu0 %v101
    %472 = vmatmul.mubr.bf16.gmra.mrb[0].mxu0 %v100
    %v473 = vpop.f32.mrb[0].mxu0
    %v474 = vadd.f32 %v171, %v473
    %v475 = vpop.f32.mrb[0].mxu0
    %v476 = vadd.f32 %v175, %v475
    %v477 = vpop.f32.mrb[0].mxu0
    %v478 = vadd.f32 %v171, %v477
    %v479 = vpop.f32.mrb[0].mxu0
    %v480 = vadd.f32 %v175, %v479
    %481 = vdwg.mxu0
    %482 = vmatprep.subr.bf16.mxu0 0
    %483 = vmatpush1.bf16.msra.mxu0 %v345
    %484 = vmatprep.subr.bf16.mxu0 0
    %485 = vmatpush1.bf16.msra.mxu0 %v348
    %486 = vmatprep.subr.bf16.mxu0 0
    %487 = vmatpush1.bf16.msra.mxu0 %v351
    %488 = vmatprep.subr.bf16.mxu0 0
    %489 = vmatpush1.bf16.msra.mxu0 %v354
    %490 = vmatprep.subr.bf16.mxu0 0
    %491 = vmatpush1.bf16.msra.mxu0 %v357
    %492 = vmatprep.subr.bf16.mxu0 0
    %493 = vmatpush1.bf16.msra.mxu0 %v360
    %494 = vmatprep.subr.bf16.mxu0 0
    %495 = vmatpush1.bf16.msra.mxu0 %v363
    %496 = vmatprep.subr.bf16.mxu0 0
    %497 = vmatpush1.bf16.msra.mxu0 %v366
    %498 = vmatprep.subr.bf16.mxu0 0
    %499 = vmatpush1.bf16.msra.mxu0 %v369
    %500 = vmatprep.subr.bf16.mxu0 0
    %501 = vmatpush1.bf16.msra.mxu0 %v372
    %502 = vmatprep.subr.bf16.mxu0 0
    %503 = vmatpush1.bf16.msra.mxu0 %v375
    %504 = vmatprep.subr.bf16.mxu0 0
    %505 = vmatpush1.bf16.msra.mxu0 %v378
    %506 = vmatprep.subr.bf16.mxu0 0
    %507 = vmatpush1.bf16.msra.mxu0 %v381
    %508 = vmatprep.subr.bf16.mxu0 0
    %509 = vmatpush1.bf16.msra.mxu0 %v384
    %510 = vmatprep.subr.bf16.mxu0 0
    %511 = vmatpush1.bf16.msra.mxu0 %v387
    %512 = vmatprep.subr.bf16.mxu0 0
    %513 = vmatpush1.bf16.msra.mxu0 %v390
    %514 = vmatprep.mubr.bf16.mxu0 %v101
    %515 = vmatmul.mubr.bf16.gmra.mrb[0].mxu0 %v100
    %v516 = vpop.f32.mrb[0].mxu0
    %v517 = vadd.f32 %v179, %v516
    %v518 = vpop.f32.mrb[0].mxu0
    %v519 = vpop.f32.mrb[0].mxu0
    %v520 = vadd.f32 %v179, %v519
    %v521 = vpop.f32.mrb[0].mxu0
    %522 = vdwg.mxu0
    %v523 = vxor.u32 %v474, 2147483648
    %v524 = vxor.u32 %v478, 2147483648
    %v525 = vmul.f32 %v523, 1.442695
    %v526 = vpow.pop %v525
    %v527 = vmul.f32 %v524, 1.442695
    %v528 = vpow.pop %v527
    %v529 = vadd.f32 %v526, 1.0
    %v530 = vadd.f32 %v528, 1.0
    %v531 = vrcp.pop %v529
    %v532 = vmul.f32 1.0, %v531
    %v533 = vrcp.pop %v530
    %v534 = vmul.f32 1.0, %v533
    %v535 = vxor.u32 %v476, 2147483648
    %v536 = vxor.u32 %v480, 2147483648
    %v537 = vmul.f32 %v535, 1.442695
    %v538 = vpow.pop %v537
    %v539 = vmul.f32 %v536, 1.442695
    %v540 = vpow.pop %v539
    %v541 = vadd.f32 %v538, 1.0
    %v542 = vadd.f32 %v540, 1.0
    %v543 = vrcp.pop %v541
    %v544 = vmul.f32 1.0, %v543
    %v545 = vrcp.pop %v542
    %v546 = vmul.f32 1.0, %v545
    %v547 = vmul.f32 %v544, %v45
    %v548 = vmul.f32 %v546, %v46
    %v549 = vpack.c.bf16 %v548, %v547
    %550 = vmatprep.subr.bf16.mxu0 0
    %551 = vmatpush1.bf16.msra.mxu0 %v549
    %552 = vmatprep.subr.bf16.mxu0 0
    %553 = vmatpush1.bf16.msra.mxu0 0
    %554 = vmatprep.subr.bf16.mxu0 0
    %555 = vmatpush1.bf16.msra.mxu0 0
    %556 = vmatprep.subr.bf16.mxu0 0
    %557 = vmatpush1.bf16.msra.mxu0 0
    %558 = vmatprep.subr.bf16.mxu0 0
    %559 = vmatpush1.bf16.msra.mxu0 0
    %560 = vmatprep.subr.bf16.mxu0 0
    %561 = vmatpush1.bf16.msra.mxu0 0
    %562 = vmatprep.subr.bf16.mxu0 0
    %563 = vmatpush1.bf16.msra.mxu0 0
    %564 = vmatprep.subr.bf16.mxu0 0
    %565 = vmatpush1.bf16.msra.mxu0 0
    %566 = vmatprep.subr.bf16.mxu0 0
    %567 = vmatpush1.bf16.msra.mxu0 0
    %568 = vmatprep.subr.bf16.mxu0 0
    %569 = vmatpush1.bf16.msra.mxu0 0
    %570 = vmatprep.subr.bf16.mxu0 0
    %571 = vmatpush1.bf16.msra.mxu0 0
    %572 = vmatprep.subr.bf16.mxu0 0
    %573 = vmatpush1.bf16.msra.mxu0 0
    %574 = vmatprep.subr.bf16.mxu0 0
    %575 = vmatpush1.bf16.msra.mxu0 0
    %576 = vmatprep.subr.bf16.mxu0 0
    %577 = vmatpush1.bf16.msra.mxu0 0
    %578 = vmatprep.subr.bf16.mxu0 0
    %579 = vmatpush1.bf16.msra.mxu0 0
    %580 = vmatprep.subr.bf16.mxu0 0
    %581 = vmatpush1.bf16.msra.mxu0 0
    %582 = vmatprep.mubr.bf16.mxu0 0
    %583 = vmatmul.mubr.bf16.gmra.mrb[0].mxu0 %v55
    %v584 = vpop.f32.mrb[0].mxu0
    %v585 = vadd.f32 0.0, %v584
    %v586 = vpop.f32.mrb[0].mxu0
    %v587 = vpop.f32.mrb[0].mxu0
    %v588 = vadd.f32 0.0, %v587
    %v589 = vpop.f32.mrb[0].mxu0
    %590 = vdwg.mxu0
    %v591 = vpack.c.bf16 %v588, %v585
    %v592 = vld [vmem:[%s5] sm:$0xf]
    %v593 = vld [vmem:[%s5 + $0x4] sm:$0xf]
    %v594 = vld [vmem:[%s5 + $0x8] sm:$0xf]
    %v595 = vld [vmem:[%s5 + $0xc] sm:$0xf]
    %v596 = vld [vmem:[%s5 + $0x10] sm:$0xf]
    %v597 = vld [vmem:[%s5 + $0x14] sm:$0xf]
    %v598 = vld [vmem:[%s5 + $0x18] sm:$0xf]
    %v599 = vld [vmem:[%s5 + $0x1c] sm:$0xf]
    %v600 = vld [vmem:[%s5 + $0x20] sm:$0xf]
    %v601 = vld [vmem:[%s5 + $0x24] sm:$0xf]
    %v602 = vld [vmem:[%s5 + $0x28] sm:$0xf]
    %v603 = vld [vmem:[%s5 + $0x2c] sm:$0xf]
    %v604 = vld [vmem:[%s5 + $0x30] sm:$0xf]
    %v605 = vld [vmem:[%s5 + $0x34] sm:$0xf]
    %v606 = vld [vmem:[%s5 + $0x38] sm:$0xf]
    %v607 = vld [vmem:[%s5 + $0x3c] sm:$0xf]
    %v608 = vld [vmem:[%s6] sm:$0x1]
    %v610 = vlaneseq
    %v611 = vshrl.u32 %v610, 7
    %v612 = vsub.s32 0, %v611
    %v613 = vrot.slane %v608, %v612
    %v631 = vunpack.c.l.b16 %v592
    %v632 = vunpack.c.l.b16 %v593
    %v633 = vunpack.c.l.b16 %v594
    %v634 = vunpack.c.l.b16 %v595
    %v635 = vunpack.c.l.b16 %v596
    %v636 = vunpack.c.l.b16 %v597
    %v637 = vunpack.c.l.b16 %v598
    %v638 = vunpack.c.l.b16 %v599
    %v639 = vunpack.c.l.b16 %v600
    %v640 = vunpack.c.l.b16 %v601
    %v641 = vunpack.c.l.b16 %v602
    %v642 = vunpack.c.l.b16 %v603
    %v643 = vunpack.c.l.b16 %v604
    %v644 = vunpack.c.l.b16 %v605
    %v645 = vunpack.c.l.b16 %v606
    %v646 = vunpack.c.l.b16 %v607
    %v647 = vpack.c.b16 %v632, %v631
    %v648 = vpack.c.b16 %v634, %v633
    %v649 = vpack.c.b16 %v636, %v635
    %v650 = vpack.c.b16 %v638, %v637
    %v651 = vpack.c.b16 %v640, %v639
    %v652 = vpack.c.b16 %v642, %v641
    %v653 = vpack.c.b16 %v644, %v643
    %v654 = vpack.c.b16 %v646, %v645
    %663 = vmatprep.subr.bf16.mxu0 0
    %664 = vmatpush1.bf16.msra.mxu0 %v647
    %665 = vmatprep.subr.bf16.mxu0 0
    %666 = vmatpush1.bf16.msra.mxu0 %v648
    %667 = vmatprep.subr.bf16.mxu0 0
    %668 = vmatpush1.bf16.msra.mxu0 %v649
    %669 = vmatprep.subr.bf16.mxu0 0
    %670 = vmatpush1.bf16.msra.mxu0 %v650
    %671 = vmatprep.subr.bf16.mxu0 0
    %672 = vmatpush1.bf16.msra.mxu0 %v651
    %673 = vmatprep.subr.bf16.mxu0 0
    %674 = vmatpush1.bf16.msra.mxu0 %v652
    %675 = vmatprep.subr.bf16.mxu0 0
    %676 = vmatpush1.bf16.msra.mxu0 %v653
    %677 = vmatprep.subr.bf16.mxu0 0
    %678 = vmatpush1.bf16.msra.mxu0 %v654
    %679 = vmatprep.subr.bf16.mxu0 0
    %680 = vmatpush1.bf16.msra.mxu0 0
    %681 = vmatprep.subr.bf16.mxu0 0
    %682 = vmatpush1.bf16.msra.mxu0 0
    %683 = vmatprep.subr.bf16.mxu0 0
    %684 = vmatpush1.bf16.msra.mxu0 0
    %685 = vmatprep.subr.bf16.mxu0 0
    %686 = vmatpush1.bf16.msra.mxu0 0
    %687 = vmatprep.subr.bf16.mxu0 0
    %688 = vmatpush1.bf16.msra.mxu0 0
    %689 = vmatprep.subr.bf16.mxu0 0
    %690 = vmatpush1.bf16.msra.mxu0 0
    %691 = vmatprep.subr.bf16.mxu0 0
    %692 = vmatpush1.bf16.msra.mxu0 0
    %693 = vmatprep.subr.bf16.mxu0 0
    %694 = vmatpush1.bf16.msra.mxu0 0
    %695 = vmatprep.mubr.bf16.mxu0 0
    %696 = vmatmul.mubr.bf16.gmra.mrb[0].mxu0 %v591
    %v697 = vpop.f32.mrb[0].mxu0
    %v698 = vadd.f32 %v613, %v697
    %v699 = vpop.f32.mrb[0].mxu0
    %v700 = vpop.f32.mrb[0].mxu0
    %v701 = vadd.f32 %v613, %v700
    %v702 = vpop.f32.mrb[0].mxu0
    %703 = vdwg.mxu0
    %v704 = vadd.f32 %v517, %v698
    %v705 = vadd.f32 %v520, %v701
    %v706 = vtanh.pop %v704
    %v707 = vtanh.pop %v705
    %v708 = vmul.f32 %v532, %v45
    %v709 = vmul.f32 %v534, %v46
    %v710 = vsub.f32 1.0, %v532
    %v711 = vsub.f32 1.0, %v534
    %v712 = vmul.f32 %v710, %v706
    %v713 = vmul.f32 %v711, %v707
    %v714 = vadd.f32 %v708, %v712
    %v715 = vadd.f32 %v709, %v713
    %716 = vst [vmem:[#allocation2] sm:$0xff] %v714
    %717 = vst [vmem:[#allocation2 + $0x8] sm:$0xff] %v715
    %v718 = vpack.c.bf16 %v715, %v714
    %s719 = scalar_lea.vmem %s2, 16
    %v720 = vld [vmem:[%s719] sm:$0xff]
    %v721 = vld [vmem:[%s719 + $0x8] sm:$0xff]
    %v722 = vpack.c.bf16 %v721, %v720
    %723 = vmatprep.subr.bf16.mxu0 %v722
    %724 = vmatpush1.bf16.msra.mxu0 %v718
    %725 = vmatprep.subr.bf16.mxu0 0
    %726 = vmatpush1.bf16.msra.mxu0 0
    %727 = vmatprep.subr.bf16.mxu0 0
    %728 = vmatpush1.bf16.msra.mxu0 0
    %729 = vmatprep.subr.bf16.mxu0 0
    %730 = vmatpush1.bf16.msra.mxu0 0
    %731 = vmatprep.subr.bf16.mxu0 0
    %732 = vmatpush1.bf16.msra.mxu0 0
    %733 = vmatprep.subr.bf16.mxu0 0
    %734 = vmatpush1.bf16.msra.mxu0 0
    %735 = vmatprep.subr.bf16.mxu0 0
    %736 = vmatpush1.bf16.msra.mxu0 0
    %737 = vmatprep.subr.bf16.mxu0 0
    %738 = vmatpush1.bf16.msra.mxu0 0
    %739 = vmatprep.subr.bf16.mxu0 0
    %740 = vmatpush1.bf16.msra.mxu0 0
    %741 = vmatprep.subr.bf16.mxu0 0
    %742 = vmatpush1.bf16.msra.mxu0 0
    %743 = vmatprep.subr.bf16.mxu0 0
    %744 = vmatpush1.bf16.msra.mxu0 0
    %745 = vmatprep.subr.bf16.mxu0 0
    %746 = vmatpush1.bf16.msra.mxu0 0
    %747 = vmatprep.subr.bf16.mxu0 0
    %748 = vmatpush1.bf16.msra.mxu0 0
    %749 = vmatprep.subr.bf16.mxu0 0
    %750 = vmatpush1.bf16.msra.mxu0 0
    %751 = vmatprep.subr.bf16.mxu0 0
    %752 = vmatpush1.bf16.msra.mxu0 0
    %753 = vmatprep.subr.bf16.mxu0 0
    %754 = vmatpush1.bf16.msra.mxu0 0
    %755 = vmatprep.mubr.bf16.mxu0 0
    %756 = vmatmul.mubr.bf16.gmra.mrb[0].mxu0 %v55
    %v757 = vpop.f32.mrb[0].mxu0
    %v758 = vadd.f32 0.0, %v757
    %v759 = vpop.f32.mrb[0].mxu0
    %v760 = vadd.f32 0.0, %v759
    %v761 = vpop.f32.mrb[0].mxu0
    %v762 = vadd.f32 0.0, %v761
    %v763 = vpop.f32.mrb[0].mxu0
    %v764 = vadd.f32 0.0, %v763
    %765 = vdwg.mxu0
    %v766 = vpack.c.bf16 %v762, %v758
    %v767 = vpack.c.bf16 %v764, %v760
    %v768 = vld [vmem:[%s7] sm:$0xff]
    %v769 = vld [vmem:[%s7 + $0x8] sm:$0xf]
    %v770 = vld [vmem:[%s7 + $0xc] sm:$0xff]
    %v771 = vld [vmem:[%s7 + $0x14] sm:$0xf]
    %v772 = vld [vmem:[%s7 + $0x18] sm:$0xff]
    %v773 = vld [vmem:[%s7 + $0x20] sm:$0xf]
    %v774 = vld [vmem:[%s7 + $0x24] sm:$0xff]
    %v775 = vld [vmem:[%s7 + $0x2c] sm:$0xf]
    %v776 = vld [vmem:[%s7 + $0x30] sm:$0xff]
    %v777 = vld [vmem:[%s7 + $0x38] sm:$0xf]
    %v778 = vld [vmem:[%s7 + $0x3c] sm:$0xff]
    %v779 = vld [vmem:[%s7 + $0x44] sm:$0xf]
    %v780 = vld [vmem:[%s7 + $0x48] sm:$0xff]
    %v781 = vld [vmem:[%s7 + $0x50] sm:$0xf]
    %v782 = vld [vmem:[%s7 + $0x54] sm:$0xff]
    %v783 = vld [vmem:[%s7 + $0x5c] sm:$0xf]
    %v784 = vld [vmem:[%s7 + $0x60] sm:$0xff]
    %v785 = vld [vmem:[%s7 + $0x68] sm:$0xf]
    %v786 = vld [vmem:[%s7 + $0x6c] sm:$0xff]
    %v787 = vld [vmem:[%s7 + $0x74] sm:$0xf]
    %v788 = vld [vmem:[%s7 + $0x78] sm:$0xff]
    %v789 = vld [vmem:[%s7 + $0x80] sm:$0xf]
    %v790 = vld [vmem:[%s7 + $0x84] sm:$0xff]
    %v791 = vld [vmem:[%s7 + $0x8c] sm:$0xf]
    %v792 = vld [vmem:[%s7 + $0x90] sm:$0xff]
    %v793 = vld [vmem:[%s7 + $0x98] sm:$0xf]
    %v794 = vld [vmem:[%s7 + $0x9c] sm:$0xff]
    %v795 = vld [vmem:[%s7 + $0xa4] sm:$0xf]
    %v796 = vld [vmem:[%s7 + $0xa8] sm:$0xff]
    %v797 = vld [vmem:[%s7 + $0xb0] sm:$0xf]
    %v798 = vld [vmem:[%s7 + $0xb4] sm:$0xff]
    %v799 = vld [vmem:[%s7 + $0xbc] sm:$0xf]
    %v800 = vld [vmem:[%s7 + $0xc0] sm:$0xff]
    %v801 = vld [vmem:[%s7 + $0xc8] sm:$0xf]
    %v802 = vld [vmem:[%s7 + $0xcc] sm:$0xff]
    %v803 = vld [vmem:[%s7 + $0xd4] sm:$0xf]
    %v804 = vld [vmem:[%s7 + $0xd8] sm:$0xff]
    %v805 = vld [vmem:[%s7 + $0xe0] sm:$0xf]
    %v806 = vld [vmem:[%s7 + $0xe4] sm:$0xff]
    %v807 = vld [vmem:[%s7 + $0xec] sm:$0xf]
    %v808 = vld [vmem:[%s7 + $0xf0] sm:$0xff]
    %v809 = vld [vmem:[%s7 + $0xf8] sm:$0xf]
    %v810 = vld [vmem:[%s7 + $0xfc] sm:$0xff]
    %v811 = vld [vmem:[%s7 + $0x104] sm:$0xf]
    %v812 = vld [vmem:[%s7 + $0x108] sm:$0xff]
    %v813 = vld [vmem:[%s7 + $0x110] sm:$0xf]
    %v814 = vld [vmem:[%s7 + $0x114] sm:$0xff]
    %v815 = vld [vmem:[%s7 + $0x11c] sm:$0xf]
    %v816 = vld [vmem:[%s7 + $0x120] sm:$0xff]
    %v817 = vld [vmem:[%s7 + $0x128] sm:$0xf]
    %v818 = vld [vmem:[%s7 + $0x12c] sm:$0xff]
    %v819 = vld [vmem:[%s7 + $0x134] sm:$0xf]
    %v820 = vld [vmem:[%s7 + $0x138] sm:$0xff]
    %v821 = vld [vmem:[%s7 + $0x140] sm:$0xf]
    %v822 = vld [vmem:[%s7 + $0x144] sm:$0xff]
    %v823 = vld [vmem:[%s7 + $0x14c] sm:$0xf]
    %v824 = vld [vmem:[%s7 + $0x150] sm:$0xff]
    %v825 = vld [vmem:[%s7 + $0x158] sm:$0xf]
    %v826 = vld [vmem:[%s7 + $0x15c] sm:$0xff]
    %v827 = vld [vmem:[%s7 + $0x164] sm:$0xf]
    %v828 = vld [vmem:[%s7 + $0x168] sm:$0xff]
    %v829 = vld [vmem:[%s7 + $0x170] sm:$0xf]
    %v830 = vld [vmem:[%s7 + $0x174] sm:$0xff]
    %v831 = vld [vmem:[%s7 + $0x17c] sm:$0xf]
    %v832 = vld [vmem:[%s8] sm:$0x7]
    %v834 = vlaneseq
    %v835 = vshrl.u32 %v834, 7
    %v836 = vsub.s32 0, %v835
    %v837 = vrot.slane %v832, %v836
    %v838 = vlaneseq
    %v839 = vshrl.u32 %v838, 7
    %v840 = vsub.s32 1, %v839
    %v841 = vrot.slane %v832, %v840
    %v842 = vlaneseq
    %v843 = vshrl.u32 %v842, 7
    %v844 = vsub.s32 2, %v843
    %v845 = vrot.slane %v832, %v844
    %v913 = vunpack.c.l.b16 %v768
    %v914 = vunpack.c.h.b16 %v768
    %v915 = vunpack.c.l.b16 %v769
    %v916 = vunpack.c.l.b16 %v770
    %v917 = vunpack.c.h.b16 %v770
    %v918 = vunpack.c.l.b16 %v771
    %v919 = vunpack.c.l.b16 %v772
    %v920 = vunpack.c.h.b16 %v772
    %v921 = vunpack.c.l.b16 %v773
    %v922 = vunpack.c.l.b16 %v774
    %v923 = vunpack.c.h.b16 %v774
    %v924 = vunpack.c.l.b16 %v775
    %v925 = vunpack.c.l.b16 %v776
    %v926 = vunpack.c.h.b16 %v776
    %v927 = vunpack.c.l.b16 %v777
    %v928 = vunpack.c.l.b16 %v778
    %v929 = vunpack.c.h.b16 %v778
    %v930 = vunpack.c.l.b16 %v779
    %v931 = vunpack.c.l.b16 %v780
    %v932 = vunpack.c.h.b16 %v780
    %v933 = vunpack.c.l.b16 %v781
    %v934 = vunpack.c.l.b16 %v782
    %v935 = vunpack.c.h.b16 %v782
    %v936 = vunpack.c.l.b16 %v783
    %v937 = vunpack.c.l.b16 %v784
    %v938 = vunpack.c.h.b16 %v784
    %v939 = vunpack.c.l.b16 %v785
    %v940 = vunpack.c.l.b16 %v786
    %v941 = vunpack.c.h.b16 %v786
    %v942 = vunpack.c.l.b16 %v787
    %v943 = vunpack.c.l.b16 %v788
    %v944 = vunpack.c.h.b16 %v788
    %v945 = vunpack.c.l.b16 %v789
    %v946 = vunpack.c.l.b16 %v790
    %v947 = vunpack.c.h.b16 %v790
    %v948 = vunpack.c.l.b16 %v791
    %v949 = vunpack.c.l.b16 %v792
    %v950 = vunpack.c.h.b16 %v792
    %v951 = vunpack.c.l.b16 %v793
    %v952 = vunpack.c.l.b16 %v794
    %v953 = vunpack.c.h.b16 %v794
    %v954 = vunpack.c.l.b16 %v795
    %v955 = vunpack.c.l.b16 %v796
    %v956 = vunpack.c.h.b16 %v796
    %v957 = vunpack.c.l.b16 %v797
    %v958 = vunpack.c.l.b16 %v798
    %v959 = vunpack.c.h.b16 %v798
    %v960 = vunpack.c.l.b16 %v799
    %v961 = vunpack.c.l.b16 %v800
    %v962 = vunpack.c.h.b16 %v800
    %v963 = vunpack.c.l.b16 %v801
    %v964 = vunpack.c.l.b16 %v802
    %v965 = vunpack.c.h.b16 %v802
    %v966 = vunpack.c.l.b16 %v803
    %v967 = vunpack.c.l.b16 %v804
    %v968 = vunpack.c.h.b16 %v804
    %v969 = vunpack.c.l.b16 %v805
    %v970 = vunpack.c.l.b16 %v806
    %v971 = vunpack.c.h.b16 %v806
    %v972 = vunpack.c.l.b16 %v807
    %v973 = vunpack.c.l.b16 %v808
    %v974 = vunpack.c.h.b16 %v808
    %v975 = vunpack.c.l.b16 %v809
    %v976 = vunpack.c.l.b16 %v810
    %v977 = vunpack.c.h.b16 %v810
    %v978 = vunpack.c.l.b16 %v811
    %v979 = vunpack.c.l.b16 %v812
    %v980 = vunpack.c.h.b16 %v812
    %v981 = vunpack.c.l.b16 %v813
    %v982 = vunpack.c.l.b16 %v814
    %v983 = vunpack.c.h.b16 %v814
    %v984 = vunpack.c.l.b16 %v815
    %v985 = vunpack.c.l.b16 %v816
    %v986 = vunpack.c.h.b16 %v816
    %v987 = vunpack.c.l.b16 %v817
    %v988 = vunpack.c.l.b16 %v818
    %v989 = vunpack.c.h.b16 %v818
    %v990 = vunpack.c.l.b16 %v819
    %v991 = vunpack.c.l.b16 %v820
    %v992 = vunpack.c.h.b16 %v820
    %v993 = vunpack.c.l.b16 %v821
    %v994 = vunpack.c.l.b16 %v822
    %v995 = vunpack.c.h.b16 %v822
    %v996 = vunpack.c.l.b16 %v823
    %v997 = vunpack.c.l.b16 %v824
    %v998 = vunpack.c.h.b16 %v824
    %v999 = vunpack.c.l.b16 %v825
    %v1000 = vunpack.c.l.b16 %v826
    %v1001 = vunpack.c.h.b16 %v826
    %v1002 = vunpack.c.l.b16 %v827
    %v1003 = vunpack.c.l.b16 %v828
    %v1004 = vunpack.c.h.b16 %v828
    %v1005 = vunpack.c.l.b16 %v829
    %v1006 = vunpack.c.l.b16 %v830
    %v1007 = vunpack.c.h.b16 %v830
    %v1008 = vunpack.c.l.b16 %v831
    %v1009 = vpack.c.b16 %v916, %v913
    %v1010 = vpack.c.b16 %v917, %v914
    %v1011 = vpack.c.b16 %v918, %v915
    %v1012 = vpack.c.b16 %v922, %v919
    %v1013 = vpack.c.b16 %v923, %v920
    %v1014 = vpack.c.b16 %v924, %v921
    %v1015 = vpack.c.b16 %v928, %v925
    %v1016 = vpack.c.b16 %v929, %v926
    %v1017 = vpack.c.b16 %v930, %v927
    %v1018 = vpack.c.b16 %v934, %v931
    %v1019 = vpack.c.b16 %v935, %v932
    %v1020 = vpack.c.b16 %v936, %v933
    %v1021 = vpack.c.b16 %v940, %v937
    %v1022 = vpack.c.b16 %v941, %v938
    %v1023 = vpack.c.b16 %v942, %v939
    %v1024 = vpack.c.b16 %v946, %v943
    %v1025 = vpack.c.b16 %v947, %v944
    %v1026 = vpack.c.b16 %v948, %v945
    %v1027 = vpack.c.b16 %v952, %v949
    %v1028 = vpack.c.b16 %v953, %v950
    %v1029 = vpack.c.b16 %v954, %v951
    %v1030 = vpack.c.b16 %v958, %v955
    %v1031 = vpack.c.b16 %v959, %v956
    %v1032 = vpack.c.b16 %v960, %v957
    %v1033 = vpack.c.b16 %v964, %v961
    %v1034 = vpack.c.b16 %v965, %v962
    %v1035 = vpack.c.b16 %v966, %v963
    %v1036 = vpack.c.b16 %v970, %v967
    %v1037 = vpack.c.b16 %v971, %v968
    %v1038 = vpack.c.b16 %v972, %v969
    %v1039 = vpack.c.b16 %v976, %v973
    %v1040 = vpack.c.b16 %v977, %v974
    %v1041 = vpack.c.b16 %v978, %v975
    %v1042 = vpack.c.b16 %v982, %v979
    %v1043 = vpack.c.b16 %v983, %v980
    %v1044 = vpack.c.b16 %v984, %v981
    %v1045 = vpack.c.b16 %v988, %v985
    %v1046 = vpack.c.b16 %v989, %v986
    %v1047 = vpack.c.b16 %v990, %v987
    %v1048 = vpack.c.b16 %v994, %v991
    %v1049 = vpack.c.b16 %v995, %v992
    %v1050 = vpack.c.b16 %v996, %v993
    %v1051 = vpack.c.b16 %v1000, %v997
    %v1052 = vpack.c.b16 %v1001, %v998
    %v1053 = vpack.c.b16 %v1002, %v999
    %v1054 = vpack.c.b16 %v1006, %v1003
    %v1055 = vpack.c.b16 %v1007, %v1004
    %v1056 = vpack.c.b16 %v1008, %v1005
    %1105 = vmatprep.subr.bf16.mxu0 %v1010
    %1106 = vmatpush1.bf16.msra.mxu0 %v1009
    %1107 = vmatprep.subr.bf16.mxu0 %v1013
    %1108 = vmatpush1.bf16.msra.mxu0 %v1012
    %1109 = vmatprep.subr.bf16.mxu0 %v1016
    %1110 = vmatpush1.bf16.msra.mxu0 %v1015
    %1111 = vmatprep.subr.bf16.mxu0 %v1019
    %1112 = vmatpush1.bf16.msra.mxu0 %v1018
    %1113 = vmatprep.subr.bf16.mxu0 %v1022
    %1114 = vmatpush1.bf16.msra.mxu0 %v1021
    %1115 = vmatprep.subr.bf16.mxu0 %v1025
    %1116 = vmatpush1.bf16.msra.mxu0 %v1024
    %1117 = vmatprep.subr.bf16.mxu0 %v1028
    %1118 = vmatpush1.bf16.msra.mxu0 %v1027
    %1119 = vmatprep.subr.bf16.mxu0 %v1031
    %1120 = vmatpush1.bf16.msra.mxu0 %v1030
    %1121 = vmatprep.subr.bf16.mxu0 %v1034
    %1122 = vmatpush1.bf16.msra.mxu0 %v1033
    %1123 = vmatprep.subr.bf16.mxu0 %v1037
    %1124 = vmatpush1.bf16.msra.mxu0 %v1036
    %1125 = vmatprep.subr.bf16.mxu0 %v1040
    %1126 = vmatpush1.bf16.msra.mxu0 %v1039
    %1127 = vmatprep.subr.bf16.mxu0 %v1043
    %1128 = vmatpush1.bf16.msra.mxu0 %v1042
    %1129 = vmatprep.subr.bf16.mxu0 %v1046
    %1130 = vmatpush1.bf16.msra.mxu0 %v1045
    %1131 = vmatprep.subr.bf16.mxu0 %v1049
    %1132 = vmatpush1.bf16.msra.mxu0 %v1048
    %1133 = vmatprep.subr.bf16.mxu0 %v1052
    %1134 = vmatpush1.bf16.msra.mxu0 %v1051
    %1135 = vmatprep.subr.bf16.mxu0 %v1055
    %1136 = vmatpush1.bf16.msra.mxu0 %v1054
    %1137 = vmatprep.mubr.bf16.mxu0 %v767
    %1138 = vmatmul.mubr.bf16.gmra.mrb[0].mxu0 %v766
    %v1139 = vpop.f32.mrb[0].mxu0
    %v1140 = vadd.f32 %v837, %v1139
    %v1141 = vpop.f32.mrb[0].mxu0
    %v1142 = vadd.f32 %v841, %v1141
    %v1143 = vpop.f32.mrb[0].mxu0
    %v1144 = vadd.f32 %v837, %v1143
    %v1145 = vpop.f32.mrb[0].mxu0
    %v1146 = vadd.f32 %v841, %v1145
    %1147 = vdwg.mxu0
    %1148 = vmatprep.subr.bf16.mxu0 0
    %1149 = vmatpush1.bf16.msra.mxu0 %v1011
    %1150 = vmatprep.subr.bf16.mxu0 0
    %1151 = vmatpush1.bf16.msra.mxu0 %v1014
    %1152 = vmatprep.subr.bf16.mxu0 0
    %1153 = vmatpush1.bf16.msra.mxu0 %v1017
    %1154 = vmatprep.subr.bf16.mxu0 0
    %1155 = vmatpush1.bf16.msra.mxu0 %v1020
    %1156 = vmatprep.subr.bf16.mxu0 0
    %1157 = vmatpush1.bf16.msra.mxu0 %v1023
    %1158 = vmatprep.subr.bf16.mxu0 0
    %1159 = vmatpush1.bf16.msra.mxu0 %v1026
    %1160 = vmatprep.subr.bf16.mxu0 0
    %1161 = vmatpush1.bf16.msra.mxu0 %v1029
    %1162 = vmatprep.subr.bf16.mxu0 0
    %1163 = vmatpush1.bf16.msra.mxu0 %v1032
    %1164 = vmatprep.subr.bf16.mxu0 0
    %1165 = vmatpush1.bf16.msra.mxu0 %v1035
    %1166 = vmatprep.subr.bf16.mxu0 0
    %1167 = vmatpush1.bf16.msra.mxu0 %v1038
    %1168 = vmatprep.subr.bf16.mxu0 0
    %1169 = vmatpush1.bf16.msra.mxu0 %v1041
    %1170 = vmatprep.subr.bf16.mxu0 0
    %1171 = vmatpush1.bf16.msra.mxu0 %v1044
    %1172 = vmatprep.subr.bf16.mxu0 0
    %1173 = vmatpush1.bf16.msra.mxu0 %v1047
    %1174 = vmatprep.subr.bf16.mxu0 0
    %1175 = vmatpush1.bf16.msra.mxu0 %v1050
    %1176 = vmatprep.subr.bf16.mxu0 0
    %1177 = vmatpush1.bf16.msra.mxu0 %v1053
    %1178 = vmatprep.subr.bf16.mxu0 0
    %1179 = vmatpush1.bf16.msra.mxu0 %v1056
    %1180 = vmatprep.mubr.bf16.mxu0 %v767
    %1181 = vmatmul.mubr.bf16.gmra.mrb[0].mxu0 %v766
    %v1182 = vpop.f32.mrb[0].mxu0
    %v1183 = vadd.f32 %v845, %v1182
    %v1184 = vpop.f32.mrb[0].mxu0
    %v1185 = vpop.f32.mrb[0].mxu0
    %v1186 = vadd.f32 %v845, %v1185
    %v1187 = vpop.f32.mrb[0].mxu0
    %1188 = vdwg.mxu0
    %v1189 = vxor.u32 %v1140, 2147483648
    %v1190 = vxor.u32 %v1144, 2147483648
    %v1191 = vmul.f32 %v1189, 1.442695
    %v1192 = vpow.pop %v1191
    %v1193 = vmul.f32 %v1190, 1.442695
    %v1194 = vpow.pop %v1193
    %v1195 = vadd.f32 %v1192, 1.0
    %v1196 = vadd.f32 %v1194, 1.0
    %v1197 = vrcp.pop %v1195
    %v1198 = vmul.f32 1.0, %v1197
    %v1199 = vrcp.pop %v1196
    %v1200 = vmul.f32 1.0, %v1199
    %v1201 = vxor.u32 %v1142, 2147483648
    %v1202 = vxor.u32 %v1146, 2147483648
    %v1203 = vmul.f32 %v1201, 1.442695
    %v1204 = vpow.pop %v1203
    %v1205 = vmul.f32 %v1202, 1.442695
    %v1206 = vpow.pop %v1205
    %v1207 = vadd.f32 %v1204, 1.0
    %v1208 = vadd.f32 %v1206, 1.0
    %v1209 = vrcp.pop %v1207
    %v1210 = vmul.f32 1.0, %v1209
    %v1211 = vrcp.pop %v1208
    %v1212 = vmul.f32 1.0, %v1211
    %v1213 = vmul.f32 %v1210, %v720
    %v1214 = vmul.f32 %v1212, %v721
    %v1215 = vpack.c.bf16 %v1214, %v1213
    %1216 = vmatprep.subr.bf16.mxu0 0
    %1217 = vmatpush1.bf16.msra.mxu0 %v1215
    %1218 = vmatprep.subr.bf16.mxu0 0
    %1219 = vmatpush1.bf16.msra.mxu0 0
    %1220 = vmatprep.subr.bf16.mxu0 0
    %1221 = vmatpush1.bf16.msra.mxu0 0
    %1222 = vmatprep.subr.bf16.mxu0 0
    %1223 = vmatpush1.bf16.msra.mxu0 0
    %1224 = vmatprep.subr.bf16.mxu0 0
    %1225 = vmatpush1.bf16.msra.mxu0 0
    %1226 = vmatprep.subr.bf16.mxu0 0
    %1227 = vmatpush1.bf16.msra.mxu0 0
    %1228 = vmatprep.subr.bf16.mxu0 0
    %1229 = vmatpush1.bf16.msra.mxu0 0
    %1230 = vmatprep.subr.bf16.mxu0 0
    %1231 = vmatpush1.bf16.msra.mxu0 0
    %1232 = vmatprep.subr.bf16.mxu0 0
    %1233 = vmatpush1.bf16.msra.mxu0 0
    %1234 = vmatprep.subr.bf16.mxu0 0
    %1235 = vmatpush1.bf16.msra.mxu0 0
    %1236 = vmatprep.subr.bf16.mxu0 0
    %1237 = vmatpush1.bf16.msra.mxu0 0
    %1238 = vmatprep.subr.bf16.mxu0 0
    %1239 = vmatpush1.bf16.msra.mxu0 0
    %1240 = vmatprep.subr.bf16.mxu0 0
    %1241 = vmatpush1.bf16.msra.mxu0 0
    %1242 = vmatprep.subr.bf16.mxu0 0
    %1243 = vmatpush1.bf16.msra.mxu0 0
    %1244 = vmatprep.subr.bf16.mxu0 0
    %1245 = vmatpush1.bf16.msra.mxu0 0
    %1246 = vmatprep.subr.bf16.mxu0 0
    %1247 = vmatpush1.bf16.msra.mxu0 0
    %1248 = vmatprep.mubr.bf16.mxu0 0
    %1249 = vmatmul.mubr.bf16.gmra.mrb[0].mxu0 %v55
    %v1250 = vpop.f32.mrb[0].mxu0
    %v1251 = vadd.f32 0.0, %v1250
    %v1252 = vpop.f32.mrb[0].mxu0
    %v1253 = vpop.f32.mrb[0].mxu0
    %v1254 = vadd.f32 0.0, %v1253
    %v1255 = vpop.f32.mrb[0].mxu0
    %1256 = vdwg.mxu0
    %v1257 = vpack.c.bf16 %v1254, %v1251
    %v1258 = vld [vmem:[%s9] sm:$0xf]
    %v1259 = vld [vmem:[%s9 + $0x4] sm:$0xf]
    %v1260 = vld [vmem:[%s9 + $0x8] sm:$0xf]
    %v1261 = vld [vmem:[%s9 + $0xc] sm:$0xf]
    %v1262 = vld [vmem:[%s9 + $0x10] sm:$0xf]
    %v1263 = vld [vmem:[%s9 + $0x14] sm:$0xf]
    %v1264 = vld [vmem:[%s9 + $0x18] sm:$0xf]
    %v1265 = vld [vmem:[%s9 + $0x1c] sm:$0xf]
    %v1266 = vld [vmem:[%s9 + $0x20] sm:$0xf]
    %v1267 = vld [vmem:[%s9 + $0x24] sm:$0xf]
    %v1268 = vld [vmem:[%s9 + $0x28] sm:$0xf]
    %v1269 = vld [vmem:[%s9 + $0x2c] sm:$0xf]
    %v1270 = vld [vmem:[%s9 + $0x30] sm:$0xf]
    %v1271 = vld [vmem:[%s9 + $0x34] sm:$0xf]
    %v1272 = vld [vmem:[%s9 + $0x38] sm:$0xf]
    %v1273 = vld [vmem:[%s9 + $0x3c] sm:$0xf]
    %v1274 = vld [vmem:[%s10] sm:$0x1]
    %v1276 = vlaneseq
    %v1277 = vshrl.u32 %v1276, 7
    %v1278 = vsub.s32 0, %v1277
    %v1279 = vrot.slane %v1274, %v1278
    %v1297 = vunpack.c.l.b16 %v1258
    %v1298 = vunpack.c.l.b16 %v1259
    %v1299 = vunpack.c.l.b16 %v1260
    %v1300 = vunpack.c.l.b16 %v1261
    %v1301 = vunpack.c.l.b16 %v1262
    %v1302 = vunpack.c.l.b16 %v1263
    %v1303 = vunpack.c.l.b16 %v1264
    %v1304 = vunpack.c.l.b16 %v1265
    %v1305 = vunpack.c.l.b16 %v1266
    %v1306 = vunpack.c.l.b16 %v1267
    %v1307 = vunpack.c.l.b16 %v1268
    %v1308 = vunpack.c.l.b16 %v1269
    %v1309 = vunpack.c.l.b16 %v1270
    %v1310 = vunpack.c.l.b16 %v1271
    %v1311 = vunpack.c.l.b16 %v1272
    %v1312 = vunpack.c.l.b16 %v1273
    %v1313 = vpack.c.b16 %v1298, %v1297
    %v1314 = vpack.c.b16 %v1300, %v1299
    %v1315 = vpack.c.b16 %v1302, %v1301
    %v1316 = vpack.c.b16 %v1304, %v1303
    %v1317 = vpack.c.b16 %v1306, %v1305
    %v1318 = vpack.c.b16 %v1308, %v1307
    %v1319 = vpack.c.b16 %v1310, %v1309
    %v1320 = vpack.c.b16 %v1312, %v1311
    %1329 = vmatprep.subr.bf16.mxu0 0
    %1330 = vmatpush1.bf16.msra.mxu0 %v1313
    %1331 = vmatprep.subr.bf16.mxu0 0
    %1332 = vmatpush1.bf16.msra.mxu0 %v1314
    %1333 = vmatprep.subr.bf16.mxu0 0
    %1334 = vmatpush1.bf16.msra.mxu0 %v1315
    %1335 = vmatprep.subr.bf16.mxu0 0
    %1336 = vmatpush1.bf16.msra.mxu0 %v1316
    %1337 = vmatprep.subr.bf16.mxu0 0
    %1338 = vmatpush1.bf16.msra.mxu0 %v1317
    %1339 = vmatprep.subr.bf16.mxu0 0
    %1340 = vmatpush1.bf16.msra.mxu0 %v1318
    %1341 = vmatprep.subr.bf16.mxu0 0
    %1342 = vmatpush1.bf16.msra.mxu0 %v1319
    %1343 = vmatprep.subr.bf16.mxu0 0
    %1344 = vmatpush1.bf16.msra.mxu0 %v1320
    %1345 = vmatprep.subr.bf16.mxu0 0
    %1346 = vmatpush1.bf16.msra.mxu0 0
    %1347 = vmatprep.subr.bf16.mxu0 0
    %1348 = vmatpush1.bf16.msra.mxu0 0
    %1349 = vmatprep.subr.bf16.mxu0 0
    %1350 = vmatpush1.bf16.msra.mxu0 0
    %1351 = vmatprep.subr.bf16.mxu0 0
    %1352 = vmatpush1.bf16.msra.mxu0 0
    %1353 = vmatprep.subr.bf16.mxu0 0
    %1354 = vmatpush1.bf16.msra.mxu0 0
    %1355 = vmatprep.subr.bf16.mxu0 0
    %1356 = vmatpush1.bf16.msra.mxu0 0
    %1357 = vmatprep.subr.bf16.mxu0 0
    %1358 = vmatpush1.bf16.msra.mxu0 0
    %1359 = vmatprep.subr.bf16.mxu0 0
    %1360 = vmatpush1.bf16.msra.mxu0 0
    %1361 = vmatprep.mubr.bf16.mxu0 0
    %1362 = vmatmul.mubr.bf16.gmra.mrb[0].mxu0 %v1257
    %v1363 = vpop.f32.mrb[0].mxu0
    %v1364 = vadd.f32 %v1279, %v1363
    %v1365 = vpop.f32.mrb[0].mxu0
    %v1366 = vpop.f32.mrb[0].mxu0
    %v1367 = vadd.f32 %v1279, %v1366
    %v1368 = vpop.f32.mrb[0].mxu0
    %1369 = vdwg.mxu0
    %v1370 = vadd.f32 %v1183, %v1364
    %v1371 = vadd.f32 %v1186, %v1367
    %v1372 = vtanh.pop %v1370
    %v1373 = vtanh.pop %v1371
    %v1374 = vmul.f32 %v1198, %v720
    %v1375 = vmul.f32 %v1200, %v721
    %v1376 = vsub.f32 1.0, %v1198
    %v1377 = vsub.f32 1.0, %v1200
    %v1378 = vmul.f32 %v1376, %v1372
    %v1379 = vmul.f32 %v1377, %v1373
    %v1380 = vadd.f32 %v1374, %v1378
    %v1381 = vadd.f32 %v1375, %v1379
    %s1382 = scalar_lea.vmem [#allocation2], 16
    %1383 = vst [vmem:[%s1382] sm:$0xff] %v1380
    %1384 = vst [vmem:[%s1382 + $0x8] sm:$0xff] %v1381
    // Predicated region
    $region46: #{forward.1} parent=1 // pred_check
      _
    $region47: #{forward.1} parent=1 // pred_check_branch
      %1386 = sbr.rel (0) target = $region49
    $region48: #{forward.1} parent=1 // pred_region
      %s1388 = ssub.s32 512, 512
      %1389 = vsyncadd [#allocation3], %s1388
      %s1390 = sshll.u32 [#allocation2], 4
      %s1391 = int_to_ptr.vmem [resolvable:$true] %s1390
      %1396 = dma.vmem_to_hbm [thread:$0]  %s1391, 512, %s11, [#allocation3], 128, 128, 8
    $region49: #{forward.1} parent=1 // pred_fallthru
      _
    // Predicated region
    $region50: #{forward.1} parent=1 // pred_check
      _
    $region51: #{forward.1} parent=1 // pred_check_branch
      %1398 = sbr.rel (0) target = $region53
    $region52: #{forward.1} parent=1 // pred_region
      %1399 = dma.done [#allocation3], 512
    $region53: #{forward.1} parent=1 // pred_fallthru
      _
    %1400 = vsyncpa [#allocation3], 1

</llo_original>
